<compile_context>
chip_gen: v7x
topology: tpu7x:2x2x1
jax: 0.10.0
libtpu: 0.0.40
codegen_flags: <defaults>
</compile_context>

<pallas_src>
import functools

import jax
import jax.numpy as jnp
from jax import lax
from jax.experimental import pallas as pl
from jax.experimental.pallas import tpu as pltpu


# ----------------------------------------------------------------------------- kernel

def _encoder_kernel(x_ref, alfa_ref, s1_ref, t1_ref, b1_ref,
                    s2_ref, t2_ref, b2_ref, w1_ref, w2_ref, res_ref, *, H):
    BBH, WC = x_ref.shape            # rows = batch_chunk * H, lanes = W * C

    x = x_ref[...]                                              # (BBH, WC) f32

    # Image-boundary masks for the vertical conv taps (hoisted, shared by both convs).
    row_in_img = lax.broadcasted_iota(jnp.int32, (BBH, WC), 0) % H
    not_top = row_in_img != 0            # row r-1 exists inside the same image
    not_bot = row_in_img != (H - 1)      # row r+1 exists inside the same image

    def conv3x3(h, w_ref):
        # 3x3 conv as ONE stacked-K lane-dense MXU matmul.
        #  * vertical taps: sublane rolls (XLU) + boundary masks instead of shift matmuls,
        #  * horizontal taps + W padding + output-channel placement: folded into the banded
        #    (3*WC, WC) weight built once in the wrapper.
        up = jnp.where(not_top, pltpu.roll(h, 1, 0), 0.0)          # out[r] = h[r-1]
        down = jnp.where(not_bot, pltpu.roll(h, BBH - 1, 0), 0.0)  # out[r] = h[r+1]
        stacked = jnp.concatenate([up, h, down], axis=1).astype(jnp.bfloat16)  # (BBH, 3*WC)
        return jnp.dot(stacked, w_ref[...], preferred_element_type=jnp.float32)

    # BN1 (folded scale/bias) + ReLU -- f32 VPU work, fully lane-dense.
    h1 = jnp.maximum(x * s1_ref[...] + t1_ref[...], 0.0)
    # Conv1: outputs land in lanes [w*C, w*C + C/2) of each w-group.
    y1 = conv3x3(h1, w1_ref) + b1_ref[...]
    # BN2 + ReLU (scale/bias are zero outside the out1 lanes, keeping unused lanes at 0).
    h2 = jnp.maximum(y1 * s2_ref[...] + t2_ref[...], 0.0)
    # Conv2: outputs duplicated into lanes [C/2, 3C/4) and [3C/4, C) of each w-group.
    y2 = conv3x3(h2, w2_ref) + b2_ref[...]

    # res = concat(out1, out2, out2) + X*Alfa  -- channel placement already done by the weights
    # and Alfa pre-expanded per row, so this is a pure elementwise sum, stored once, lane-dense.
    res_ref[...] = (y1 + y2 + x * alfa_ref[...]).astype(res_ref.dtype)


# ------------------------------------------------------------------ parameter preprocessing

def _banded_conv_weight(w_hwio, W, group, out_offsets):
    """Fold the horizontal taps (incl. zero padding in W) and the output-channel placement of a
    3x3 conv into a single stacked-K (3*W*group, W*group) bf16 matrix acting on
    [rows(r-1), rows(r), rows(r+1)] stacked along lanes."""
    kh, kw, cin, cout = w_hwio.shape
    big = jnp.zeros((kh, W * group, W * group), jnp.float32)
    for wo in range(W):
        for dx in range(kw):
            wi = wo + dx - (kw // 2)
            if 0 <= wi < W:
                for off in out_offsets:
                    big = big.at[:, wi * group: wi * group + cin,
                                 wo * group + off: wo * group + off + cout].set(w_hwio[:, dx])
    # K blocks ordered [ky=0 (row r-1), ky=1 (row r), ky=2 (row r+1)] to match the kernel stack.
    return big.reshape(kh * W * group, W * group).astype(jnp.bfloat16)


def _placed(vals, W, group, offset):
    """Tile a per-channel vector into a (1, W*group) lane layout at `offset` inside each
    w-group of `group` lanes (zeros elsewhere)."""
    v = jnp.zeros((W, group), jnp.float32)
    v = v.at[:, offset:offset + vals.shape[0]].set(vals[None, :])
    return v.reshape(1, W * group)


def prepare_encoder_params(alfa, bn1_scale, bn1_bias, w1, b1, bn2_scale, bn2_bias, w2, b2,
                           *, H, W):
    """Convert per-channel / HWIO parameters into the lane-dense layouts the kernel consumes."""
    _, _, C, C1 = w1.shape
    C2 = w2.shape[3]
    assert C1 == C // 2 and C2 == C // 4 and C1 + 2 * C2 == C, "input_dim must be divisible by 4"
    B = alfa.shape[0]

    # Pre-expand Alfa to a per-row (B*H, W*C) array (same layout as x2d) -- removes the
    # in-kernel reshape/broadcast.
    alfa_row = jnp.broadcast_to(alfa.reshape(B, 1, 1, C), (B, H, W, C)).reshape(B * H, W * C)

    s1 = _placed(bn1_scale, W, C, 0)
    t1 = _placed(bn1_bias, W, C, 0)
    b1p = _placed(b1, W, C, 0)
    s2p = _placed(bn2_scale, W, C, 0)
    t2p = _placed(bn2_bias, W, C, 0)
    b2p = _placed(b2, W, C, C1) + _placed(b2, W, C, C1 + C2)
    w1p = _banded_conv_weight(w1, W, C, (0,))
    w2p = _banded_conv_weight(w2, W, C, (C1, C1 + C2))
    return alfa_row, s1, t1, b1p, s2p, t2p, b2p, w1p, w2p


def _default_vmem_limit_bytes():
    """Per-generation scoped-VMEM budget: ~3/4 of physical, capped (v7x: 64 MiB physical)."""
    cap = None
    get_info = getattr(pltpu, "get_tpu_info", None)
    if get_info is not None:
        try:
            cap = getattr(get_info(), "vmem_capacity_bytes", None)
        except Exception:
            cap = None
    if not cap:
        cap = 64 * 1024 * 1024                    # conservative fallback (v7x physical)
    return int(min(cap * 3 // 4, 96 * 1024 * 1024))


def _pick_batch_block(B, H, *, max_rows=2048):
    """Largest divisor of B with bb*H rows <= max_rows, bb*H a multiple of 8 (clean (8,128)
    blocks), and at least 2 grid steps when B >= 2 so v7x can shard across both TensorCores."""
    min_steps = 2 if B >= 2 else 1
    best = None
    for d in range(1, B + 1):
        if B % d:
            continue
        if d * H > max_rows or (d * H) % 8 != 0:
            continue
        if B // d < min_steps:
            continue
        best = d
    return best if best is not None else B        # fallback: whole batch in one step


# ----------------------------------------------------------------------------- wrapper

def encoder_module(x, alfa, bn1_scale, bn1_bias, w1, b1, bn2_scale, bn2_bias, w2, b2,
                   *, batch_block=None, vmem_limit_bytes=None):
    """x: (B, H, W, C) NHWC.  Returns (residual_out, pooled_out), both (B, H, W, C)."""
    B, H, W, C = x.shape
    WC = W * C

    if batch_block is None:
        batch_block = _pick_batch_block(B, H)
    bb = batch_block
    assert B % bb == 0
    if vmem_limit_bytes is None:
        vmem_limit_bytes = _default_vmem_limit_bytes()

    alfa_row, s1, t1, b1p, s2p, t2p, b2p, w1p, w2p = prepare_encoder_params(
        alfa, bn1_scale, bn1_bias, w1, b1, bn2_scale, bn2_bias, w2, b2, H=H, W=W)

    x2d = x.reshape(B * H, WC)                      # lane-dense (rows, W*C) view -- free reshape

    row_spec = pl.BlockSpec((bb * H, WC), lambda i: (i, 0))
    vec_spec = pl.BlockSpec((1, WC), lambda i: (0, 0))
    w_spec = pl.BlockSpec((3 * WC, WC), lambda i: (0, 0))

    res2d = pl.pallas_call(
        functools.partial(_encoder_kernel, H=H),
        out_shape=jax.ShapeDtypeStruct((B * H, WC), x.dtype),
        grid=(B // bb,),
        in_specs=[row_spec, row_spec, vec_spec, vec_spec, vec_spec,
                  vec_spec, vec_spec, vec_spec, w_spec, w_spec],
        out_specs=row_spec,
        compiler_params=pltpu.CompilerParams(
            dimension_semantics=("parallel",),        # batch chunks are independent (v7x: 2 TCs)
            vmem_limit_bytes=vmem_limit_bytes),
    )(x2d, alfa_row, s1, t1, b1p, s2p, t2p, b2p, w1p, w2p)

    res = res2d.reshape(B, H, W, C)
    # MaxPool2d(1) (kernel 1, stride 1) is the identity: return the same array twice instead of
    # computing / writing a second output.
    return res, res


# ----------------------------------------------------------------------------- reference

def reference(x, alfa, bn1s, bn1b, w1, b1, bn2s, bn2b, w2, b2):
    """Pure-JAX reference (NHWC) matching the PyTorch forward."""
    dn = ('NHWC', 'HWIO', 'NHWC')
    conv = functools.partial(lax.conv_general_dilated, window_strides=(1, 1),
                             padding='SAME', dimension_numbers=dn,
                             precision=lax.Precision.HIGHEST)
    h1 = jnp.maximum(x * bn1s[None, None, None, :] + bn1b[None, None, None, :], 0.0)
    out1 = conv(h1, w1) + b1[None, None, None, :]
    h2 = jnp.maximum(out1 * bn2s[None, None, None, :] + bn2b[None, None, None, :], 0.0)
    out2 = conv(h2, w2) + b2[None, None, None, :]
    res = jnp.concatenate([out1, out2, out2], axis=-1) + x * alfa
    return res, res


# ----------------------------------------------------------------------------- test

if __name__ == "__main__":
    B, C, H, W = 2, 16, 8, 8          # batch=2, input_dim=16, spatial=8x8  (W*C = 128 lanes)
    C1, C2 = C // 2, C // 4
    eps = 1e-5

    key = jax.random.PRNGKey(0)
    keys = jax.random.split(key, 16)

    x = jax.random.normal(keys[0], (B, H, W, C), jnp.float32)
    alfa = jax.random.normal(keys[1], (B, 1, 1, C), jnp.float32)        # torch Alfa (B,C,1,1)

    w1 = 0.1 * jax.random.normal(keys[2], (3, 3, C, C1), jnp.float32)   # HWIO
    b1 = 0.1 * jax.random.normal(keys[3], (C1,), jnp.float32)
    w2 = 0.1 * jax.random.normal(keys[4], (3, 3, C1, C2), jnp.float32)
    b2 = 0.1 * jax.random.normal(keys[5], (C2,), jnp.float32)

    def bn_fold(kg, kb, km, kv, n):
        gamma = 1.0 + 0.1 * jax.random.normal(kg, (n,), jnp.float32)
        beta = 0.1 * jax.random.normal(kb, (n,), jnp.float32)
        mean = 0.1 * jax.random.normal(km, (n,), jnp.float32)
        var = 1.0 + 0.1 * jax.random.uniform(kv, (n,), jnp.float32)
        scale = gamma / jnp.sqrt(var + eps)
        bias = beta - mean * scale
        return scale, bias

    bn1s, bn1b = bn_fold(keys[6], keys[7], keys[8], keys[9], C)
    bn2s, bn2b = bn_fold(keys[10], keys[11], keys[12], keys[13], C1)

    args = (x, alfa, bn1s, bn1b, w1, b1, bn2s, bn2b, w2, b2)

    res_out, pool_out = jax.jit(encoder_module)(*args)
    jax.block_until_ready((res_out, pool_out))

    ref_res, ref_pool = reference(*args)

    assert res_out.shape == (B, H, W, C) and pool_out.shape == (B, H, W, C)
    # Kernel uses bf16 MXU operands vs an f32 HIGHEST-precision reference, so allow ~1e-2
    # tolerance (measured error is a few 1e-3 at these sizes).
    assert jnp.allclose(res_out, ref_res, rtol=1e-2, atol=1e-2), "residual mismatch"
    assert jnp.allclose(pool_out, ref_pool, rtol=1e-2, atol=1e-2), "pooling mismatch"

    print("KERNEL_OK")
</pallas_src>

<mosaic_0001>
module attributes {stable_mosaic.version = 11 : i64} {
  func.func @_encoder_kernel(%arg0: i32, %arg1: memref<8x128xf32, #tpu.memory_space<vmem>>, %arg2: memref<8x128xf32, #tpu.memory_space<vmem>>, %arg3: memref<1x128xf32, #tpu.memory_space<vmem>>, %arg4: memref<1x128xf32, #tpu.memory_space<vmem>>, %arg5: memref<1x128xf32, #tpu.memory_space<vmem>>, %arg6: memref<1x128xf32, #tpu.memory_space<vmem>>, %arg7: memref<1x128xf32, #tpu.memory_space<vmem>>, %arg8: memref<1x128xf32, #tpu.memory_space<vmem>>, %arg9: memref<384x128xbf16, #tpu.memory_space<vmem>>, %arg10: memref<384x128xbf16, #tpu.memory_space<vmem>>, %arg11: memref<8x128xf32, #tpu.memory_space<vmem>>) attributes {dimension_semantics = [#tpu.dimension_semantics<parallel>], iteration_bounds = array<i64: 2>, scalar_prefetch = 0 : i64, scratch_operands = 0 : i64, tpu.core_type = #tpu.core_type<tc>, window_params = [{transform_indices = @transform_0, window_bounds = array<i64: 8, 128>}, {transform_indices = @transform_1, window_bounds = array<i64: 8, 128>}, {pipeline_mode = #tpu.pipeline_mode<synchronous>, transform_indices = @transform_2, window_bounds = array<i64: 1, 128>}, {pipeline_mode = #tpu.pipeline_mode<synchronous>, transform_indices = @transform_3, window_bounds = array<i64: 1, 128>}, {pipeline_mode = #tpu.pipeline_mode<synchronous>, transform_indices = @transform_4, window_bounds = array<i64: 1, 128>}, {pipeline_mode = #tpu.pipeline_mode<synchronous>, transform_indices = @transform_5, window_bounds = array<i64: 1, 128>}, {pipeline_mode = #tpu.pipeline_mode<synchronous>, transform_indices = @transform_6, window_bounds = array<i64: 1, 128>}, {pipeline_mode = #tpu.pipeline_mode<synchronous>, transform_indices = @transform_7, window_bounds = array<i64: 1, 128>}, {pipeline_mode = #tpu.pipeline_mode<synchronous>, transform_indices = @transform_8, window_bounds = array<i64: 384, 128>}, {pipeline_mode = #tpu.pipeline_mode<synchronous>, transform_indices = @transform_9, window_bounds = array<i64: 384, 128>}, {transform_indices = @transform_10, window_bounds = array<i64: 8, 128>}]} {
    %c0 = arith.constant 0 : index
    %c0_0 = arith.constant 0 : index
    %0 = vector.load %arg1[%c0, %c0_0] : memref<8x128xf32, #tpu.memory_space<vmem>>, vector<8x128xf32>
    %1 = tpu.iota {dimensions = array<i32: 0>} : vector<8x128xi32>
    %c8_i32 = arith.constant 8 : i32
    %c0_i32 = arith.constant 0 : i32
    %2 = arith.cmpi eq, %c8_i32, %c0_i32 : i32
    %c1_i32 = arith.constant 1 : i32
    %3 = arith.select %2, %c1_i32, %c8_i32 : i32
    %4 = vector.broadcast %3 : i32 to vector<8x128xi32>
    %5 = arith.remsi %1, %4 : vector<8x128xi32>
    %c0_i32_1 = arith.constant 0 : i32
    %6 = vector.broadcast %c0_i32_1 : i32 to vector<8x128xi32>
    %7 = arith.cmpi ne, %5, %6 : vector<8x128xi32>
    %c0_i32_2 = arith.constant 0 : i32
    %8 = vector.broadcast %c0_i32_2 : i32 to vector<8x128xi32>
    %9 = arith.cmpi slt, %5, %8 : vector<8x128xi32>
    %c0_i32_3 = arith.constant 0 : i32
    %10 = arith.cmpi slt, %3, %c0_i32_3 : i32
    %11 = vector.broadcast %10 : i1 to vector<8x128xi1>
    %12 = vector.broadcast %11 : vector<8x128xi1> to vector<8x128xi1>
    %13 = arith.xori %9, %12 : vector<8x128xi1>
    %14 = arith.andi %13, %7 : vector<8x128xi1>
    %15 = vector.broadcast %3 : i32 to vector<8x128xi32>
    %16 = arith.addi %5, %15 : vector<8x128xi32>
    %17 = arith.select %14, %16, %5 : vector<8x128xi1>, vector<8x128xi32>
    %c0_i32_4 = arith.constant 0 : i32
    %18 = vector.broadcast %c0_i32_4 : i32 to vector<8x128xi32>
    %19 = arith.cmpi ne, %17, %18 : vector<8x128xi32>
    %c7_i32 = arith.constant 7 : i32
    %20 = vector.broadcast %c7_i32 : i32 to vector<8x128xi32>
    %21 = arith.cmpi ne, %17, %20 : vector<8x128xi32>
    %c0_5 = arith.constant 0 : index
    %c0_6 = arith.constant 0 : index
    %22 = vector.load %arg3[%c0_5, %c0_6] : memref<1x128xf32, #tpu.memory_space<vmem>>, vector<1x128xf32>
    %23 = vector.broadcast %22 : vector<1x128xf32> to vector<8x128xf32>
    %24 = arith.mulf %0, %23 : vector<8x128xf32>
    %c0_7 = arith.constant 0 : index
    %c0_8 = arith.constant 0 : index
    %25 = vector.load %arg4[%c0_7, %c0_8] : memref<1x128xf32, #tpu.memory_space<vmem>>, vector<1x128xf32>
    %26 = vector.broadcast %25 : vector<1x128xf32> to vector<8x128xf32>
    %27 = arith.addf %24, %26 : vector<8x128xf32>
    %cst = arith.constant 0.000000e+00 : f32
    %28 = vector.broadcast %cst : f32 to vector<8x128xf32>
    %29 = arith.maximumf %27, %28 : vector<8x128xf32>
    %c1_i32_9 = arith.constant 1 : i32
    %30 = tpu.dynamic_rotate %29 by %c1_i32_9 dim 0 : vector<8x128xf32>, i32 -> vector<8x128xf32>
    %cst_10 = arith.constant 0.000000e+00 : f32
    %31 = vector.broadcast %cst_10 : f32 to vector<8x128xf32>
    %32 = arith.select %19, %30, %31 : vector<8x128xi1>, vector<8x128xf32>
    %c7_i32_11 = arith.constant 7 : i32
    %33 = tpu.dynamic_rotate %29 by %c7_i32_11 dim 0 : vector<8x128xf32>, i32 -> vector<8x128xf32>
    %cst_12 = arith.constant 0.000000e+00 : f32
    %34 = vector.broadcast %cst_12 : f32 to vector<8x128xf32>
    %35 = arith.select %21, %33, %34 : vector<8x128xi1>, vector<8x128xf32>
    %36 = tpu.concatenate %32, %29, %35 in 1 : vector<8x128xf32>, vector<8x128xf32>, vector<8x128xf32> -> vector<8x384xf32>
    %37 = arith.truncf %36 : vector<8x384xf32> to vector<8x384xbf16>
    %c0_13 = arith.constant 0 : index
    %c0_14 = arith.constant 0 : index
    %38 = vector.load %arg9[%c0_13, %c0_14] : memref<384x128xbf16, #tpu.memory_space<vmem>>, vector<384x128xbf16>
    %cst_15 = arith.constant dense<0.000000e+00> : vector<8x128xf32>
    %39 = tpu.matmul %37, %38, %cst_15 {dimension_numbers = #tpu.dot_dimension_numbers<[1], [0], [0], [1], [0, 0, 1, 1], [], []>} : vector<8x384xbf16>, vector<384x128xbf16>, vector<8x128xf32> -> vector<8x128xf32>
    %c0_16 = arith.constant 0 : index
    %c0_17 = arith.constant 0 : index
    %40 = vector.load %arg5[%c0_16, %c0_17] : memref<1x128xf32, #tpu.memory_space<vmem>>, vector<1x128xf32>
    %41 = vector.broadcast %40 : vector<1x128xf32> to vector<8x128xf32>
    %42 = arith.addf %39, %41 : vector<8x128xf32>
    %c0_18 = arith.constant 0 : index
    %c0_19 = arith.constant 0 : index
    %43 = vector.load %arg6[%c0_18, %c0_19] : memref<1x128xf32, #tpu.memory_space<vmem>>, vector<1x128xf32>
    %44 = vector.broadcast %43 : vector<1x128xf32> to vector<8x128xf32>
    %45 = arith.mulf %42, %44 : vector<8x128xf32>
    %c0_20 = arith.constant 0 : index
    %c0_21 = arith.constant 0 : index
    %46 = vector.load %arg7[%c0_20, %c0_21] : memref<1x128xf32, #tpu.memory_space<vmem>>, vector<1x128xf32>
    %47 = vector.broadcast %46 : vector<1x128xf32> to vector<8x128xf32>
    %48 = arith.addf %45, %47 : vector<8x128xf32>
    %cst_22 = arith.constant 0.000000e+00 : f32
    %49 = vector.broadcast %cst_22 : f32 to vector<8x128xf32>
    %50 = arith.maximumf %48, %49 : vector<8x128xf32>
    %c1_i32_23 = arith.constant 1 : i32
    %51 = tpu.dynamic_rotate %50 by %c1_i32_23 dim 0 : vector<8x128xf32>, i32 -> vector<8x128xf32>
    %cst_24 = arith.constant 0.000000e+00 : f32
    %52 = vector.broadcast %cst_24 : f32 to vector<8x128xf32>
    %53 = arith.select %19, %51, %52 : vector<8x128xi1>, vector<8x128xf32>
    %c7_i32_25 = arith.constant 7 : i32
    %54 = tpu.dynamic_rotate %50 by %c7_i32_25 dim 0 : vector<8x128xf32>, i32 -> vector<8x128xf32>
    %cst_26 = arith.constant 0.000000e+00 : f32
    %55 = vector.broadcast %cst_26 : f32 to vector<8x128xf32>
    %56 = arith.select %21, %54, %55 : vector<8x128xi1>, vector<8x128xf32>
    %57 = tpu.concatenate %53, %50, %56 in 1 : vector<8x128xf32>, vector<8x128xf32>, vector<8x128xf32> -> vector<8x384xf32>
    %58 = arith.truncf %57 : vector<8x384xf32> to vector<8x384xbf16>
    %c0_27 = arith.constant 0 : index
    %c0_28 = arith.constant 0 : index
    %59 = vector.load %arg10[%c0_27, %c0_28] : memref<384x128xbf16, #tpu.memory_space<vmem>>, vector<384x128xbf16>
    %cst_29 = arith.constant dense<0.000000e+00> : vector<8x128xf32>
    %60 = tpu.matmul %58, %59, %cst_29 {dimension_numbers = #tpu.dot_dimension_numbers<[1], [0], [0], [1], [0, 0, 1, 1], [], []>} : vector<8x384xbf16>, vector<384x128xbf16>, vector<8x128xf32> -> vector<8x128xf32>
    %c0_30 = arith.constant 0 : index
    %c0_31 = arith.constant 0 : index
    %61 = vector.load %arg8[%c0_30, %c0_31] : memref<1x128xf32, #tpu.memory_space<vmem>>, vector<1x128xf32>
    %62 = vector.broadcast %61 : vector<1x128xf32> to vector<8x128xf32>
    %63 = arith.addf %60, %62 : vector<8x128xf32>
    %64 = arith.addf %42, %63 : vector<8x128xf32>
    %c0_32 = arith.constant 0 : index
    %c0_33 = arith.constant 0 : index
    %65 = vector.load %arg2[%c0_32, %c0_33] : memref<8x128xf32, #tpu.memory_space<vmem>>, vector<8x128xf32>
    %66 = arith.mulf %0, %65 : vector<8x128xf32>
    %67 = arith.addf %64, %66 : vector<8x128xf32>
    %c0_34 = arith.constant 0 : index
    %c0_35 = arith.constant 0 : index
    %68 = vector.load %arg11[%c0_34, %c0_35] : memref<8x128xf32, #tpu.memory_space<vmem>>, vector<8x128xf32>
    tpu.vector_store %arg11[%c0_34, %c0_35], %67 {strides = array<i32>} : memref<8x128xf32, #tpu.memory_space<vmem>>, vector<8x128xf32>,
    return
  }
  func.func @transform_0(%arg0: i32) -> (i32, i32) {
    %c0_i32 = arith.constant 0 : i32
    %c0_i32_0 = arith.constant 0 : i32
    return %arg0, %c0_i32 : i32, i32
  }
  func.func @transform_1(%arg0: i32) -> (i32, i32) {
    %c0_i32 = arith.constant 0 : i32
    %c0_i32_0 = arith.constant 0 : i32
    return %arg0, %c0_i32 : i32, i32
  }
  func.func @transform_2(%arg0: i32) -> (i32, i32) {
    %c0_i32 = arith.constant 0 : i32
    %c0_i32_0 = arith.constant 0 : i32
    %c0_i32_1 = arith.constant 0 : i32
    return %c0_i32, %c0_i32_0 : i32, i32
  }
  func.func @transform_3(%arg0: i32) -> (i32, i32) {
    %c0_i32 = arith.constant 0 : i32
    %c0_i32_0 = arith.constant 0 : i32
    %c0_i32_1 = arith.constant 0 : i32
    return %c0_i32, %c0_i32_0 : i32, i32
  }
  func.func @transform_4(%arg0: i32) -> (i32, i32) {
    %c0_i32 = arith.constant 0 : i32
    %c0_i32_0 = arith.constant 0 : i32
    %c0_i32_1 = arith.constant 0 : i32
    return %c0_i32, %c0_i32_0 : i32, i32
  }
  func.func @transform_5(%arg0: i32) -> (i32, i32) {
    %c0_i32 = arith.constant 0 : i32
    %c0_i32_0 = arith.constant 0 : i32
    %c0_i32_1 = arith.constant 0 : i32
    return %c0_i32, %c0_i32_0 : i32, i32
  }
  func.func @transform_6(%arg0: i32) -> (i32, i32) {
    %c0_i32 = arith.constant 0 : i32
    %c0_i32_0 = arith.constant 0 : i32
    %c0_i32_1 = arith.constant 0 : i32
    return %c0_i32, %c0_i32_0 : i32, i32
  }
  func.func @transform_7(%arg0: i32) -> (i32, i32) {
    %c0_i32 = arith.constant 0 : i32
    %c0_i32_0 = arith.constant 0 : i32
    %c0_i32_1 = arith.constant 0 : i32
    return %c0_i32, %c0_i32_0 : i32, i32
  }
  func.func @transform_8(%arg0: i32) -> (i32, i32) {
    %c0_i32 = arith.constant 0 : i32
    %c0_i32_0 = arith.constant 0 : i32
    %c0_i32_1 = arith.constant 0 : i32
    return %c0_i32, %c0_i32_0 : i32, i32
  }
  func.func @transform_9(%arg0: i32) -> (i32, i32) {
    %c0_i32 = arith.constant 0 : i32
    %c0_i32_0 = arith.constant 0 : i32
    %c0_i32_1 = arith.constant 0 : i32
    return %c0_i32, %c0_i32_0 : i32, i32
  }
  func.func @transform_10(%arg0: i32) -> (i32, i32) {
    %c0_i32 = arith.constant 0 : i32
    %c0_i32_0 = arith.constant 0 : i32
    return %arg0, %c0_i32 : i32, i32
  }
}

</mosaic_0001>

<llo_original>
// kernel: encoder_module.1
$region0: #{encoder_module.1}
  #allocation0 [shape = 'u32[]', space=smem, size = 0x4, offset = 0x4, fixed_abs, tag = 'smem constant byte address 0x4 - core index']
  #allocation1 [shape = 'u32[144,128]{1,0:T(1,128)}', space=vmem, size = 0x12000, scoped, tag = 'internal scratch']
  %s0 = inlined_call_operand.vmem [shape: f32[16,128], index: 0, kind: input, shape index: {}]
  %s1 = inlined_call_operand.vmem [shape: f32[16,128], index: 1, kind: input, shape index: {}]
  %s2 = inlined_call_operand.vmem [shape: f32[1,128], index: 2, kind: input, shape index: {}]
  %s3 = inlined_call_operand.vmem [shape: f32[1,128], index: 3, kind: input, shape index: {}]
  %s4 = inlined_call_operand.vmem [shape: f32[1,128], index: 4, kind: input, shape index: {}]
  %s5 = inlined_call_operand.vmem [shape: f32[1,128], index: 5, kind: input, shape index: {}]
  %s6 = inlined_call_operand.vmem [shape: f32[1,128], index: 6, kind: input, shape index: {}]
  %s7 = inlined_call_operand.vmem [shape: f32[1,128], index: 7, kind: input, shape index: {}]
  %s8 = inlined_call_operand.vmem [shape: bf16[384,128], index: 8, kind: input, shape index: {}]
  %s9 = inlined_call_operand.vmem [shape: bf16[384,128], index: 9, kind: input, shape index: {}]
  %s10 = inlined_call_operand.vmem [shape: f32[16,128], index: 10, kind: output, shape index: {}]
  %s11 = sld [smem:[#allocation0]]
  $region73: #{encoder_module.1} parent=0
    _
  %s13 = ssub.s32 1, %s11
  %s14 = scalar_select 0, %s13, %s11
  loop: start=0, step=1, limit=4
  $region2: #{encoder_module.1} parent=0 // loop_pre_header
    _
  $region3: #{encoder_module.1} parent=0 // loop_header
    %s16 = sphi 0, %s20
    %p17 = scmp.ge.s32.totalorder %s16, 4
    %s26 = sphi 0, %s28
    %s29 = sphi 0, %s26
    %s30 = sphi 0, %s29
    %s46 = sphi 0, %s30
    %s52 = sphi 0, %s54
    %s55 = sphi 0, %s52
    %s56 = sphi 0, %s55
    %s72 = sphi 0, %s56
    %s76 = sphi 0, %s76
    %s78 = sphi 0, %s76
    %s79 = sphi 0, %s78
    %s93 = sphi 0, %s79
    %s97 = sphi 0, %s97
    %s99 = sphi 0, %s97
    %s100 = sphi 0, %s99
    %s114 = sphi 0, %s100
    %s118 = sphi 0, %s118
    %s120 = sphi 0, %s118
    %s121 = sphi 0, %s120
    %s135 = sphi 0, %s121
    %s139 = sphi 0, %s139
    %s141 = sphi 0, %s139
    %s142 = sphi 0, %s141
    %s156 = sphi 0, %s142
    %s160 = sphi 0, %s160
    %s162 = sphi 0, %s160
    %s163 = sphi 0, %s162
    %s177 = sphi 0, %s163
    %s181 = sphi 0, %s181
    %s183 = sphi 0, %s181
    %s184 = sphi 0, %s183
    %s198 = sphi 0, %s184
    %s202 = sphi 0, %s202
    %s204 = sphi 0, %s202
    %s205 = sphi 0, %s204
    %s219 = sphi 0, %s205
    %s223 = sphi 0, %s223
    %s225 = sphi 0, %s223
    %s226 = sphi 0, %s225
    %s240 = sphi 0, %s226
    %s246 = sphi 0, %s248
    %s249 = sphi 0, %s246
    %s250 = sphi 0, %s249
    %s266 = sphi 0, %s250
  $region4: #{encoder_module.1} parent=0 // loop_header_branch
    %19 = sbr.rel (%p17) target = $region8
  $region5: #{encoder_module.1} parent=0 // loop_body
    %s21 = ssub.s32 %s16, 1
    %s22 = ssub.s32 %s16, 2
    %s23 = sadd.s32 %s16, 1
    %s24 = ssub.s32 %s16, %s23
    %p25 = scmp.eq.s32.totalorder %s24, 0
    %s27 = sadd.s32 %s26, 1
    %s28 = scalar_select %p25, %s26, %s27
    %p31 = pneg %p25
    %p32 = scmp.eq.s32.totalorder %s16, 1
    %p33 = por %p31, %p32
    %p34 = scmp.ne.s32.totalorder %s26, %s29
    %p35 = scmp.eq.s32.totalorder %s16, 0
    %p36 = por %p34, %p35
    %p37 = scmp.ne.s32.totalorder %s26, %s29
    %p38 = scmp.eq.s32.totalorder %s21, 1
    %p39 = por %p37, %p38
    %p40 = scmp.ne.s32.totalorder %s29, %s30
    %p41 = scmp.eq.s32.totalorder %s21, 0
    %p42 = por %p40, %p41
    %p43 = scmp.ne.s32.totalorder %s29, %s30
    %p44 = scmp.eq.s32.totalorder %s22, 1
    %p45 = por %p43, %p44
    %p47 = scmp.ne.s32.totalorder %s30, %s46
    %p48 = scmp.eq.s32.totalorder %s22, 0
    %p49 = por %p47, %p48
    %s50 = ssub.s32 %s16, %s23
    %p51 = scmp.eq.s32.totalorder %s50, 0
    %s53 = sadd.s32 %s52, 1
    %s54 = scalar_select %p51, %s52, %s53
    %p57 = pneg %p51
    %p58 = scmp.eq.s32.totalorder %s16, 1
    %p59 = por %p57, %p58
    %p60 = scmp.ne.s32.totalorder %s52, %s55
    %p61 = scmp.eq.s32.totalorder %s16, 0
    %p62 = por %p60, %p61
    %p63 = scmp.ne.s32.totalorder %s52, %s55
    %p64 = scmp.eq.s32.totalorder %s21, 1
    %p65 = por %p63, %p64
    %p66 = scmp.ne.s32.totalorder %s55, %s56
    %p67 = scmp.eq.s32.totalorder %s21, 0
    %p68 = por %p66, %p67
    %p69 = scmp.ne.s32.totalorder %s55, %s56
    %p70 = scmp.eq.s32.totalorder %s22, 1
    %p71 = por %p69, %p70
    %p73 = scmp.ne.s32.totalorder %s56, %s72
    %p74 = scmp.eq.s32.totalorder %s22, 0
    %p75 = por %p73, %p74
    %s77 = sadd.s32 %s76, 1
    %p80 = scmp.eq.s32.totalorder %s16, 1
    %p81 = scmp.ne.s32.totalorder %s76, %s78
    %p82 = scmp.eq.s32.totalorder %s16, 0
    %p83 = por %p81, %p82
    %p84 = scmp.ne.s32.totalorder %s76, %s78
    %p85 = scmp.eq.s32.totalorder %s21, 1
    %p86 = por %p84, %p85
    %p87 = scmp.ne.s32.totalorder %s78, %s79
    %p88 = scmp.eq.s32.totalorder %s21, 0
    %p89 = por %p87, %p88
    %p90 = scmp.ne.s32.totalorder %s78, %s79
    %p91 = scmp.eq.s32.totalorder %s22, 1
    %p92 = por %p90, %p91
    %p94 = scmp.ne.s32.totalorder %s79, %s93
    %p95 = scmp.eq.s32.totalorder %s22, 0
    %p96 = por %p94, %p95
    %s98 = sadd.s32 %s97, 1
    %p101 = scmp.eq.s32.totalorder %s16, 1
    %p102 = scmp.ne.s32.totalorder %s97, %s99
    %p103 = scmp.eq.s32.totalorder %s16, 0
    %p104 = por %p102, %p103
    %p105 = scmp.ne.s32.totalorder %s97, %s99
    %p106 = scmp.eq.s32.totalorder %s21, 1
    %p107 = por %p105, %p106
    %p108 = scmp.ne.s32.totalorder %s99, %s100
    %p109 = scmp.eq.s32.totalorder %s21, 0
    %p110 = por %p108, %p109
    %p111 = scmp.ne.s32.totalorder %s99, %s100
    %p112 = scmp.eq.s32.totalorder %s22, 1
    %p113 = por %p111, %p112
    %p115 = scmp.ne.s32.totalorder %s100, %s114
    %p116 = scmp.eq.s32.totalorder %s22, 0
    %p117 = por %p115, %p116
    %s119 = sadd.s32 %s118, 1
    %p122 = scmp.eq.s32.totalorder %s16, 1
    %p123 = scmp.ne.s32.totalorder %s118, %s120
    %p124 = scmp.eq.s32.totalorder %s16, 0
    %p125 = por %p123, %p124
    %p126 = scmp.ne.s32.totalorder %s118, %s120
    %p127 = scmp.eq.s32.totalorder %s21, 1
    %p128 = por %p126, %p127
    %p129 = scmp.ne.s32.totalorder %s120, %s121
    %p130 = scmp.eq.s32.totalorder %s21, 0
    %p131 = por %p129, %p130
    %p132 = scmp.ne.s32.totalorder %s120, %s121
    %p133 = scmp.eq.s32.totalorder %s22, 1
    %p134 = por %p132, %p133
    %p136 = scmp.ne.s32.totalorder %s121, %s135
    %p137 = scmp.eq.s32.totalorder %s22, 0
    %p138 = por %p136, %p137
    %s140 = sadd.s32 %s139, 1
    %p143 = scmp.eq.s32.totalorder %s16, 1
    %p144 = scmp.ne.s32.totalorder %s139, %s141
    %p145 = scmp.eq.s32.totalorder %s16, 0
    %p146 = por %p144, %p145
    %p147 = scmp.ne.s32.totalorder %s139, %s141
    %p148 = scmp.eq.s32.totalorder %s21, 1
    %p149 = por %p147, %p148
    %p150 = scmp.ne.s32.totalorder %s141, %s142
    %p151 = scmp.eq.s32.totalorder %s21, 0
    %p152 = por %p150, %p151
    %p153 = scmp.ne.s32.totalorder %s141, %s142
    %p154 = scmp.eq.s32.totalorder %s22, 1
    %p155 = por %p153, %p154
    %p157 = scmp.ne.s32.totalorder %s142, %s156
    %p158 = scmp.eq.s32.totalorder %s22, 0
    %p159 = por %p157, %p158
    %s161 = sadd.s32 %s160, 1
    %p164 = scmp.eq.s32.totalorder %s16, 1
    %p165 = scmp.ne.s32.totalorder %s160, %s162
    %p166 = scmp.eq.s32.totalorder %s16, 0
    %p167 = por %p165, %p166
    %p168 = scmp.ne.s32.totalorder %s160, %s162
    %p169 = scmp.eq.s32.totalorder %s21, 1
    %p170 = por %p168, %p169
    %p171 = scmp.ne.s32.totalorder %s162, %s163
    %p172 = scmp.eq.s32.totalorder %s21, 0
    %p173 = por %p171, %p172
    %p174 = scmp.ne.s32.totalorder %s162, %s163
    %p175 = scmp.eq.s32.totalorder %s22, 1
    %p176 = por %p174, %p175
    %p178 = scmp.ne.s32.totalorder %s163, %s177
    %p179 = scmp.eq.s32.totalorder %s22, 0
    %p180 = por %p178, %p179
    %s182 = sadd.s32 %s181, 1
    %p185 = scmp.eq.s32.totalorder %s16, 1
    %p186 = scmp.ne.s32.totalorder %s181, %s183
    %p187 = scmp.eq.s32.totalorder %s16, 0
    %p188 = por %p186, %p187
    %p189 = scmp.ne.s32.totalorder %s181, %s183
    %p190 = scmp.eq.s32.totalorder %s21, 1
    %p191 = por %p189, %p190
    %p192 = scmp.ne.s32.totalorder %s183, %s184
    %p193 = scmp.eq.s32.totalorder %s21, 0
    %p194 = por %p192, %p193
    %p195 = scmp.ne.s32.totalorder %s183, %s184
    %p196 = scmp.eq.s32.totalorder %s22, 1
    %p197 = por %p195, %p196
    %p199 = scmp.ne.s32.totalorder %s184, %s198
    %p200 = scmp.eq.s32.totalorder %s22, 0
    %p201 = por %p199, %p200
    %s203 = sadd.s32 %s202, 1
    %p206 = scmp.eq.s32.totalorder %s16, 1
    %p207 = scmp.ne.s32.totalorder %s202, %s204
    %p208 = scmp.eq.s32.totalorder %s16, 0
    %p209 = por %p207, %p208
    %p210 = scmp.ne.s32.totalorder %s202, %s204
    %p211 = scmp.eq.s32.totalorder %s21, 1
    %p212 = por %p210, %p211
    %p213 = scmp.ne.s32.totalorder %s204, %s205
    %p214 = scmp.eq.s32.totalorder %s21, 0
    %p215 = por %p213, %p214
    %p216 = scmp.ne.s32.totalorder %s204, %s205
    %p217 = scmp.eq.s32.totalorder %s22, 1
    %p218 = por %p216, %p217
    %p220 = scmp.ne.s32.totalorder %s205, %s219
    %p221 = scmp.eq.s32.totalorder %s22, 0
    %p222 = por %p220, %p221
    %s224 = sadd.s32 %s223, 1
    %p227 = scmp.eq.s32.totalorder %s16, 1
    %p228 = scmp.ne.s32.totalorder %s223, %s225
    %p229 = scmp.eq.s32.totalorder %s16, 0
    %p230 = por %p228, %p229
    %p231 = scmp.ne.s32.totalorder %s223, %s225
    %p232 = scmp.eq.s32.totalorder %s21, 1
    %p233 = por %p231, %p232
    %p234 = scmp.ne.s32.totalorder %s225, %s226
    %p235 = scmp.eq.s32.totalorder %s21, 0
    %p236 = por %p234, %p235
    %p237 = scmp.ne.s32.totalorder %s225, %s226
    %p238 = scmp.eq.s32.totalorder %s22, 1
    %p239 = por %p237, %p238
    %p241 = scmp.ne.s32.totalorder %s226, %s240
    %p242 = scmp.eq.s32.totalorder %s22, 0
    %p243 = por %p241, %p242
    %s244 = ssub.s32 %s16, %s23
    %p245 = scmp.eq.s32.totalorder %s244, 0
    %s247 = sadd.s32 %s246, 1
    %s248 = scalar_select %p245, %s246, %s247
    %p251 = pneg %p245
    %p252 = scmp.eq.s32.totalorder %s16, 1
    %p253 = por %p251, %p252
    %p254 = scmp.ne.s32.totalorder %s246, %s249
    %p255 = scmp.eq.s32.totalorder %s16, 0
    %p256 = por %p254, %p255
    %p257 = scmp.ne.s32.totalorder %s246, %s249
    %p258 = scmp.eq.s32.totalorder %s21, 1
    %p259 = por %p257, %p258
    %p260 = scmp.ne.s32.totalorder %s249, %s250
    %p261 = scmp.eq.s32.totalorder %s21, 0
    %p262 = por %p260, %p261
    %p263 = scmp.ne.s32.totalorder %s249, %s250
    %p264 = scmp.eq.s32.totalorder %s22, 1
    %p265 = por %p263, %p264
    %p267 = scmp.ne.s32.totalorder %s250, %s266
    %p268 = scmp.eq.s32.totalorder %s22, 0
    %p269 = por %p267, %p268
    %p270 = scmp.le.s32.totalorder 1, %s16
    %p271 = scmp.lt.s32.totalorder %s16, 3
    %p272 = pnand %p270, %p271
    %p273 = pneg %p272
    // Predicated region
    $region9: #{encoder_module.1} parent=5 // pred_check
      _
    $region10: #{encoder_module.1} parent=5 // pred_check_branch
      %275 = sbr.rel (%p272) target = $region12
    $region11: #{encoder_module.1} parent=5 // pred_region
      %s276 = ssub.s32 %s16, 1
      // Predicated region
      $region13: #{encoder_module.1} parent=11 // pred_check
        %p277 = pneg %p89
      $region14: #{encoder_module.1} parent=11 // pred_check_branch
        %279 = sbr.rel (%p277) target = $region16
      $region15: #{encoder_module.1} parent=11 // pred_region
        _
      $region16: #{encoder_module.1} parent=11 // pred_fallthru
        _
      // Predicated region
      $region17: #{encoder_module.1} parent=11 // pred_check
        %p280 = pneg %p110
      $region18: #{encoder_module.1} parent=11 // pred_check_branch
        %282 = sbr.rel (%p280) target = $region20
      $region19: #{encoder_module.1} parent=11 // pred_region
        _
      $region20: #{encoder_module.1} parent=11 // pred_fallthru
        _
      // Predicated region
      $region21: #{encoder_module.1} parent=11 // pred_check
        %p283 = pneg %p131
      $region22: #{encoder_module.1} parent=11 // pred_check_branch
        %285 = sbr.rel (%p283) target = $region24
      $region23: #{encoder_module.1} parent=11 // pred_region
        _
      $region24: #{encoder_module.1} parent=11 // pred_fallthru
        _
      // Predicated region
      $region25: #{encoder_module.1} parent=11 // pred_check
        %p286 = pneg %p152
      $region26: #{encoder_module.1} parent=11 // pred_check_branch
        %288 = sbr.rel (%p286) target = $region28
      $region27: #{encoder_module.1} parent=11 // pred_region
        _
      $region28: #{encoder_module.1} parent=11 // pred_fallthru
        _
      // Predicated region
      $region29: #{encoder_module.1} parent=11 // pred_check
        %p289 = pneg %p173
      $region30: #{encoder_module.1} parent=11 // pred_check_branch
        %291 = sbr.rel (%p289) target = $region32
      $region31: #{encoder_module.1} parent=11 // pred_region
        _
      $region32: #{encoder_module.1} parent=11 // pred_fallthru
        _
      // Predicated region
      $region33: #{encoder_module.1} parent=11 // pred_check
        %p292 = pneg %p194
      $region34: #{encoder_module.1} parent=11 // pred_check_branch
        %294 = sbr.rel (%p292) target = $region36
      $region35: #{encoder_module.1} parent=11 // pred_region
        _
      $region36: #{encoder_module.1} parent=11 // pred_fallthru
        _
      // Predicated region
      $region37: #{encoder_module.1} parent=11 // pred_check
        %p295 = pneg %p215
      $region38: #{encoder_module.1} parent=11 // pred_check_branch
        %297 = sbr.rel (%p295) target = $region40
      $region39: #{encoder_module.1} parent=11 // pred_region
        _
      $region40: #{encoder_module.1} parent=11 // pred_fallthru
        _
      // Predicated region
      $region41: #{encoder_module.1} parent=11 // pred_check
        %p298 = pneg %p236
      $region42: #{encoder_module.1} parent=11 // pred_check_branch
        %300 = sbr.rel (%p298) target = $region44
      $region43: #{encoder_module.1} parent=11 // pred_region
        _
      $region44: #{encoder_module.1} parent=11 // pred_fallthru
        _
    $region12: #{encoder_module.1} parent=5 // pred_fallthru
      _
    %p301 = scmp.lt.s32.totalorder %s16, 2
    // Predicated region
    $region45: #{encoder_module.1} parent=5 // pred_check
      %p302 = pneg %p301
    $region46: #{encoder_module.1} parent=5 // pred_check_branch
      %304 = sbr.rel (%p302) target = $region48
    $region47: #{encoder_module.1} parent=5 // pred_region
      // Predicated region
      $region49: #{encoder_module.1} parent=47 // pred_check
        %p305 = pneg %p36
      $region50: #{encoder_module.1} parent=47 // pred_check_branch
        %307 = sbr.rel (%p305) target = $region52
      $region51: #{encoder_module.1} parent=47 // pred_region
        %p308 = scmp.lt.s32.totalorder %s16, 1
        %s309 = scalar_select %p308, %s16, 1
        %s310 = smul.addr %s309, 8
        %s311 = scalar_lea.vmem %s0, %s310
      $region52: #{encoder_module.1} parent=47 // pred_fallthru
        _
      // Predicated region
      $region53: #{encoder_module.1} parent=47 // pred_check
        %p312 = pneg %p62
      $region54: #{encoder_module.1} parent=47 // pred_check_branch
        %314 = sbr.rel (%p312) target = $region56
      $region55: #{encoder_module.1} parent=47 // pred_region
        %p315 = scmp.lt.s32.totalorder %s16, 1
        %s316 = scalar_select %p315, %s16, 1
        %s317 = smul.addr %s316, 8
        %s318 = scalar_lea.vmem %s1, %s317
      $region56: #{encoder_module.1} parent=47 // pred_fallthru
        _
    $region48: #{encoder_module.1} parent=5 // pred_fallthru
      _
    %p319 = scmp.le.s32.totalorder 1, %s16
    %p320 = scmp.lt.s32.totalorder %s16, 3
    %p321 = pnand %p319, %p320
    %p322 = pneg %p321
    // Predicated region
    $region57: #{encoder_module.1} parent=5 // pred_check
      _
    $region58: #{encoder_module.1} parent=5 // pred_check_branch
      %324 = sbr.rel (%p321) target = $region60
    $region59: #{encoder_module.1} parent=5 // pred_region
      %s325 = ssub.s32 %s16, 1
      %p326 = scmp.lt.s32.totalorder %s21, 1
      %s327 = scalar_select %p326, %s21, 1
      %s328 = smul.addr %s327, 8
      %s329 = scalar_lea.vmem %s0, %s328
      %p330 = pneg %p42
      %p331 = pneg %p39
      %p332 = scmp.lt.s32.totalorder %s21, 1
      %s333 = scalar_select %p332, %s21, 1
      %s334 = smul.addr %s333, 8
      %s335 = scalar_lea.vmem %s1, %s334
      %p336 = pneg %p68
      %p337 = pneg %p65
      %p338 = pneg %p89
      %p339 = pneg %p86
      %p340 = pneg %p110
      %p341 = pneg %p107
      %p342 = pneg %p131
      %p343 = pneg %p128
      %p344 = pneg %p152
      %p345 = pneg %p149
      %p346 = pneg %p173
      %p347 = pneg %p170
      %p348 = pneg %p194
      %p349 = pneg %p191
      %p350 = pneg %p215
      %p351 = pneg %p212
      %p352 = pneg %p236
      %p353 = pneg %p233
      %p354 = pneg %p262
      %p355 = pneg %p259
      %p356 = scmp.lt.s32.totalorder %s21, 1
      %s357 = scalar_select %p356, %s21, 1
      %s358 = smul.addr %s357, 8
      %s359 = scalar_lea.vmem %s10, %s358
      %p360 = scmp.lt.s32.totalorder %s21, 1
      %s361 = scalar_select %p360, %s21, 1
      %s362 = smul.addr %s361, 8
      %s363 = scalar_lea.vmem %s0, %s362
      %p364 = scmp.lt.s32.totalorder %s21, 1
      %s365 = scalar_select %p364, %s21, 1
      %s366 = smul.addr %s365, 8
      %s367 = scalar_lea.vmem %s1, %s366
      %p368 = scmp.lt.s32.totalorder %s21, 1
      %s369 = scalar_select %p368, %s21, 1
      %s370 = smul.addr %s369, 8
      %s371 = scalar_lea.vmem %s10, %s370
      %v373 = vld [vmem:[%s363] sm:$0xff]
      %v374 = vlaneseq
      %v375 = vshrl.u32 %v374, 7
      %vm376 = vcmp.lt.s32.totalorder %v375, 0
      %v377 = vsub.s32 0, %v375
      %v378 = vsel %vm376, %v377, %v375
      %v379 = vshrl.u32 %v378, 3
      %v380 = vand.u32 %v378, 7
      %v381 = vsub.s32 0, %v380
      %v382 = vsel %vm376, %v381, %v380
      %vm383 = vcmp.ne.s32.totalorder %v382, 0
      %vm384 = vcmp.lt.s32.totalorder %v382, 0
      %vm385 = vmand %vm384, %vm383
      %v386 = vadd.s32 %v382, 8
      %v387 = vsel %vm385, %v386, %v382
      %vm388 = vcmp.ne.s32.totalorder %v387, 0
      %vm389 = vcmp.ne.s32.totalorder %v387, 7
      %v390 = vld [vmem:[%s2] sm:$0x1]
      %v392 = vlaneseq
      %v393 = vshrl.u32 %v392, 7
      %v394 = vsub.s32 0, %v393
      %v395 = vrot.slane %v390, %v394
      %v397 = vmul.f32 %v373, %v395
      %v398 = vld [vmem:[%s3] sm:$0x1]
      %v400 = vlaneseq
      %v401 = vshrl.u32 %v400, 7
      %v402 = vsub.s32 0, %v401
      %v403 = vrot.slane %v398, %v402
      %v405 = vadd.f32 %v397, %v403
      %v406 = vmax.f32 %v405, 0.0
      %v407 = vrot.slane %v406, 7
      %v408 = vsel %vm388, %v407, 0.0
      %v409 = vrot.slane %v406, 1
      %v410 = vsel %vm389, %v409, 0.0
      %v411 = vpack.c.bf16 %v408, %v408
      %v412 = vpack.c.bf16 %v406, %v406
      %v413 = vpack.c.bf16 %v410, %v410
      %v414 = vld [vmem:[%s8] sm:$0xf]
      %v415 = vld [vmem:[%s8 + $0x4] sm:$0xf]
      %v416 = vld [vmem:[%s8 + $0x8] sm:$0xf]
      %v417 = vld [vmem:[%s8 + $0xc] sm:$0xf]
      %v418 = vld [vmem:[%s8 + $0x10] sm:$0xf]
      %v419 = vld [vmem:[%s8 + $0x14] sm:$0xf]
      %v420 = vld [vmem:[%s8 + $0x18] sm:$0xf]
      %v421 = vld [vmem:[%s8 + $0x1c] sm:$0xf]
      %v422 = vld [vmem:[%s8 + $0x20] sm:$0xf]
      %v423 = vld [vmem:[%s8 + $0x24] sm:$0xf]
      %v424 = vld [vmem:[%s8 + $0x28] sm:$0xf]
      %v425 = vld [vmem:[%s8 + $0x2c] sm:$0xf]
      %v426 = vld [vmem:[%s8 + $0x30] sm:$0xf]
      %v427 = vld [vmem:[%s8 + $0x34] sm:$0xf]
      %v428 = vld [vmem:[%s8 + $0x38] sm:$0xf]
      %v429 = vld [vmem:[%s8 + $0x3c] sm:$0xf]
      %v430 = vld [vmem:[%s8 + $0x40] sm:$0xf]
      %v431 = vld [vmem:[%s8 + $0x44] sm:$0xf]
      %v432 = vld [vmem:[%s8 + $0x48] sm:$0xf]
      %v433 = vld [vmem:[%s8 + $0x4c] sm:$0xf]
      %v434 = vld [vmem:[%s8 + $0x50] sm:$0xf]
      %v435 = vld [vmem:[%s8 + $0x54] sm:$0xf]
      %v436 = vld [vmem:[%s8 + $0x58] sm:$0xf]
      %v437 = vld [vmem:[%s8 + $0x5c] sm:$0xf]
      %v438 = vld [vmem:[%s8 + $0x60] sm:$0xf]
      %v439 = vld [vmem:[%s8 + $0x64] sm:$0xf]
      %v440 = vld [vmem:[%s8 + $0x68] sm:$0xf]
      %v441 = vld [vmem:[%s8 + $0x6c] sm:$0xf]
      %v442 = vld [vmem:[%s8 + $0x70] sm:$0xf]
      %v443 = vld [vmem:[%s8 + $0x74] sm:$0xf]
      %v444 = vld [vmem:[%s8 + $0x78] sm:$0xf]
      %v445 = vld [vmem:[%s8 + $0x7c] sm:$0xf]
      %v446 = vld [vmem:[%s8 + $0x80] sm:$0xf]
      %v447 = vld [vmem:[%s8 + $0x84] sm:$0xf]
      %v448 = vld [vmem:[%s8 + $0x88] sm:$0xf]
      %v449 = vld [vmem:[%s8 + $0x8c] sm:$0xf]
      %v450 = vld [vmem:[%s8 + $0x90] sm:$0xf]
      %v451 = vld [vmem:[%s8 + $0x94] sm:$0xf]
      %v452 = vld [vmem:[%s8 + $0x98] sm:$0xf]
      %v453 = vld [vmem:[%s8 + $0x9c] sm:$0xf]
      %v454 = vld [vmem:[%s8 + $0xa0] sm:$0xf]
      %v455 = vld [vmem:[%s8 + $0xa4] sm:$0xf]
      %v456 = vld [vmem:[%s8 + $0xa8] sm:$0xf]
      %v457 = vld [vmem:[%s8 + $0xac] sm:$0xf]
      %v458 = vld [vmem:[%s8 + $0xb0] sm:$0xf]
      %v459 = vld [vmem:[%s8 + $0xb4] sm:$0xf]
      %v460 = vld [vmem:[%s8 + $0xb8] sm:$0xf]
      %v461 = vld [vmem:[%s8 + $0xbc] sm:$0xf]
      %v462 = vld [vmem:[%s4] sm:$0x1]
      %v464 = vlaneseq
      %v465 = vshrl.u32 %v464, 7
      %v466 = vsub.s32 0, %v465
      %v467 = vrot.slane %v462, %v466
      %v517 = vunpack.c.l.b16 %v414
      %v518 = vunpack.c.l.b16 %v415
      %v519 = vunpack.c.l.b16 %v416
      %v520 = vunpack.c.l.b16 %v417
      %v521 = vunpack.c.l.b16 %v418
      %v522 = vunpack.c.l.b16 %v419
      %v523 = vunpack.c.l.b16 %v420
      %v524 = vunpack.c.l.b16 %v421
      %v525 = vunpack.c.l.b16 %v422
      %v526 = vunpack.c.l.b16 %v423
      %v527 = vunpack.c.l.b16 %v424
      %v528 = vunpack.c.l.b16 %v425
      %v529 = vunpack.c.l.b16 %v426
      %v530 = vunpack.c.l.b16 %v427
      %v531 = vunpack.c.l.b16 %v428
      %v532 = vunpack.c.l.b16 %v429
      %v533 = vunpack.c.l.b16 %v430
      %v534 = vunpack.c.l.b16 %v431
      %v535 = vunpack.c.l.b16 %v432
      %v536 = vunpack.c.l.b16 %v433
      %v537 = vunpack.c.l.b16 %v434
      %v538 = vunpack.c.l.b16 %v435
      %v539 = vunpack.c.l.b16 %v436
      %v540 = vunpack.c.l.b16 %v437
      %v541 = vunpack.c.l.b16 %v438
      %v542 = vunpack.c.l.b16 %v439
      %v543 = vunpack.c.l.b16 %v440
      %v544 = vunpack.c.l.b16 %v441
      %v545 = vunpack.c.l.b16 %v442
      %v546 = vunpack.c.l.b16 %v443
      %v547 = vunpack.c.l.b16 %v444
      %v548 = vunpack.c.l.b16 %v445
      %v549 = vunpack.c.l.b16 %v446
      %v550 = vunpack.c.l.b16 %v447
      %v551 = vunpack.c.l.b16 %v448
      %v552 = vunpack.c.l.b16 %v449
      %v553 = vunpack.c.l.b16 %v450
      %v554 = vunpack.c.l.b16 %v451
      %v555 = vunpack.c.l.b16 %v452
      %v556 = vunpack.c.l.b16 %v453
      %v557 = vunpack.c.l.b16 %v454
      %v558 = vunpack.c.l.b16 %v455
      %v559 = vunpack.c.l.b16 %v456
      %v560 = vunpack.c.l.b16 %v457
      %v561 = vunpack.c.l.b16 %v458
      %v562 = vunpack.c.l.b16 %v459
      %v563 = vunpack.c.l.b16 %v460
      %v564 = vunpack.c.l.b16 %v461
      %v565 = vpack.c.b16 %v518, %v517
      %v566 = vpack.c.b16 %v520, %v519
      %v567 = vpack.c.b16 %v522, %v521
      %v568 = vpack.c.b16 %v524, %v523
      %v569 = vpack.c.b16 %v526, %v525
      %v570 = vpack.c.b16 %v528, %v527
      %v571 = vpack.c.b16 %v530, %v529
      %v572 = vpack.c.b16 %v532, %v531
      %v573 = vpack.c.b16 %v534, %v533
      %v574 = vpack.c.b16 %v536, %v535
      %v575 = vpack.c.b16 %v538, %v537
      %v576 = vpack.c.b16 %v540, %v539
      %v577 = vpack.c.b16 %v542, %v541
      %v578 = vpack.c.b16 %v544, %v543
      %v579 = vpack.c.b16 %v546, %v545
      %v580 = vpack.c.b16 %v548, %v547
      %v581 = vpack.c.b16 %v550, %v549
      %v582 = vpack.c.b16 %v552, %v551
      %v583 = vpack.c.b16 %v554, %v553
      %v584 = vpack.c.b16 %v556, %v555
      %v585 = vpack.c.b16 %v558, %v557
      %v586 = vpack.c.b16 %v560, %v559
      %v587 = vpack.c.b16 %v562, %v561
      %v588 = vpack.c.b16 %v564, %v563
      %613 = vmatprep.subr.bf16.mxu0 0
      %614 = vmatpush1.bf16.msra.mxu0 %v565
      %615 = vmatprep.subr.bf16.mxu0 0
      %616 = vmatpush1.bf16.msra.mxu0 %v566
      %617 = vmatprep.subr.bf16.mxu0 0
      %618 = vmatpush1.bf16.msra.mxu0 %v567
      %619 = vmatprep.subr.bf16.mxu0 0
      %620 = vmatpush1.bf16.msra.mxu0 %v568
      %621 = vmatprep.subr.bf16.mxu0 0
      %622 = vmatpush1.bf16.msra.mxu0 %v569
      %623 = vmatprep.subr.bf16.mxu0 0
      %624 = vmatpush1.bf16.msra.mxu0 %v570
      %625 = vmatprep.subr.bf16.mxu0 0
      %626 = vmatpush1.bf16.msra.mxu0 %v571
      %627 = vmatprep.subr.bf16.mxu0 0
      %628 = vmatpush1.bf16.msra.mxu0 %v572
      %629 = vmatprep.subr.bf16.mxu0 0
      %630 = vmatpush1.bf16.msra.mxu0 %v573
      %631 = vmatprep.subr.bf16.mxu0 0
      %632 = vmatpush1.bf16.msra.mxu0 %v574
      %633 = vmatprep.subr.bf16.mxu0 0
      %634 = vmatpush1.bf16.msra.mxu0 %v575
      %635 = vmatprep.subr.bf16.mxu0 0
      %636 = vmatpush1.bf16.msra.mxu0 %v576
      %637 = vmatprep.subr.bf16.mxu0 0
      %638 = vmatpush1.bf16.msra.mxu0 %v577
      %639 = vmatprep.subr.bf16.mxu0 0
      %640 = vmatpush1.bf16.msra.mxu0 %v578
      %641 = vmatprep.subr.bf16.mxu0 0
      %642 = vmatpush1.bf16.msra.mxu0 %v579
      %643 = vmatprep.subr.bf16.mxu0 0
      %644 = vmatpush1.bf16.msra.mxu0 %v580
      %645 = vmatprep.mubr.bf16.mxu0 %v412
      %646 = vmatmul.mubr.bf16.gmra.mrb[0].mxu0 %v411
      %v647 = vpop.f32.mrb[0].mxu0
      %v648 = vadd.f32 %v467, %v647
      %v649 = vpop.f32.mrb[0].mxu0
      %v650 = vpop.f32.mrb[0].mxu0
      %v651 = vpop.f32.mrb[0].mxu0
      %652 = vdwg.mxu0
      %653 = vmatprep.subr.bf16.mxu0 0
      %654 = vmatpush1.bf16.msra.mxu0 %v581
      %655 = vmatprep.subr.bf16.mxu0 0
      %656 = vmatpush1.bf16.msra.mxu0 %v582
      %657 = vmatprep.subr.bf16.mxu0 0
      %658 = vmatpush1.bf16.msra.mxu0 %v583
      %659 = vmatprep.subr.bf16.mxu0 0
      %660 = vmatpush1.bf16.msra.mxu0 %v584
      %661 = vmatprep.subr.bf16.mxu0 0
      %662 = vmatpush1.bf16.msra.mxu0 %v585
      %663 = vmatprep.subr.bf16.mxu0 0
      %664 = vmatpush1.bf16.msra.mxu0 %v586
      %665 = vmatprep.subr.bf16.mxu0 0
      %666 = vmatpush1.bf16.msra.mxu0 %v587
      %667 = vmatprep.subr.bf16.mxu0 0
      %668 = vmatpush1.bf16.msra.mxu0 %v588
      %669 = vmatprep.subr.bf16.mxu0 0
      %670 = vmatpush1.bf16.msra.mxu0 0
      %671 = vmatprep.subr.bf16.mxu0 0
      %672 = vmatpush1.bf16.msra.mxu0 0
      %673 = vmatprep.subr.bf16.mxu0 0
      %674 = vmatpush1.bf16.msra.mxu0 0
      %675 = vmatprep.subr.bf16.mxu0 0
      %676 = vmatpush1.bf16.msra.mxu0 0
      %677 = vmatprep.subr.bf16.mxu0 0
      %678 = vmatpush1.bf16.msra.mxu0 0
      %679 = vmatprep.subr.bf16.mxu0 0
      %680 = vmatpush1.bf16.msra.mxu0 0
      %681 = vmatprep.subr.bf16.mxu0 0
      %682 = vmatpush1.bf16.msra.mxu0 0
      %683 = vmatprep.subr.bf16.mxu0 0
      %684 = vmatpush1.bf16.msra.mxu0 0
      %685 = vmatprep.mubr.bf16.mxu0 0
      %686 = vmatmul.mubr.bf16.gmra.mrb[0].mxu0 %v413
      %v687 = vpop.f32.mrb[0].mxu0
      %v688 = vadd.f32 %v648, %v687
      %v689 = vpop.f32.mrb[0].mxu0
      %v690 = vpop.f32.mrb[0].mxu0
      %v691 = vpop.f32.mrb[0].mxu0
      %692 = vdwg.mxu0
      %v693 = vld [vmem:[%s5] sm:$0x1]
      %v695 = vlaneseq
      %v696 = vshrl.u32 %v695, 7
      %v697 = vsub.s32 0, %v696
      %v698 = vrot.slane %v693, %v697
      %v700 = vmul.f32 %v688, %v698
      %v701 = vld [vmem:[%s6] sm:$0x1]
      %v703 = vlaneseq
      %v704 = vshrl.u32 %v703, 7
      %v705 = vsub.s32 0, %v704
      %v706 = vrot.slane %v701, %v705
      %v708 = vadd.f32 %v700, %v706
      %v709 = vmax.f32 %v708, 0.0
      %v710 = vrot.slane %v709, 7
      %v711 = vsel %vm388, %v710, 0.0
      %v712 = vrot.slane %v709, 1
      %v713 = vsel %vm389, %v712, 0.0
      %v714 = vpack.c.bf16 %v711, %v711
      %v715 = vpack.c.bf16 %v709, %v709
      %v716 = vpack.c.bf16 %v713, %v713
      %v717 = vld [vmem:[%s9] sm:$0xf]
      %v718 = vld [vmem:[%s9 + $0x4] sm:$0xf]
      %v719 = vld [vmem:[%s9 + $0x8] sm:$0xf]
      %v720 = vld [vmem:[%s9 + $0xc] sm:$0xf]
      %v721 = vld [vmem:[%s9 + $0x10] sm:$0xf]
      %v722 = vld [vmem:[%s9 + $0x14] sm:$0xf]
      %v723 = vld [vmem:[%s9 + $0x18] sm:$0xf]
      %v724 = vld [vmem:[%s9 + $0x1c] sm:$0xf]
      %v725 = vld [vmem:[%s9 + $0x20] sm:$0xf]
      %v726 = vld [vmem:[%s9 + $0x24] sm:$0xf]
      %v727 = vld [vmem:[%s9 + $0x28] sm:$0xf]
      %v728 = vld [vmem:[%s9 + $0x2c] sm:$0xf]
      %v729 = vld [vmem:[%s9 + $0x30] sm:$0xf]
      %v730 = vld [vmem:[%s9 + $0x34] sm:$0xf]
      %v731 = vld [vmem:[%s9 + $0x38] sm:$0xf]
      %v732 = vld [vmem:[%s9 + $0x3c] sm:$0xf]
      %v733 = vld [vmem:[%s9 + $0x40] sm:$0xf]
      %v734 = vld [vmem:[%s9 + $0x44] sm:$0xf]
      %v735 = vld [vmem:[%s9 + $0x48] sm:$0xf]
      %v736 = vld [vmem:[%s9 + $0x4c] sm:$0xf]
      %v737 = vld [vmem:[%s9 + $0x50] sm:$0xf]
      %v738 = vld [vmem:[%s9 + $0x54] sm:$0xf]
      %v739 = vld [vmem:[%s9 + $0x58] sm:$0xf]
      %v740 = vld [vmem:[%s9 + $0x5c] sm:$0xf]
      %v741 = vld [vmem:[%s9 + $0x60] sm:$0xf]
      %v742 = vld [vmem:[%s9 + $0x64] sm:$0xf]
      %v743 = vld [vmem:[%s9 + $0x68] sm:$0xf]
      %v744 = vld [vmem:[%s9 + $0x6c] sm:$0xf]
      %v745 = vld [vmem:[%s9 + $0x70] sm:$0xf]
      %v746 = vld [vmem:[%s9 + $0x74] sm:$0xf]
      %v747 = vld [vmem:[%s9 + $0x78] sm:$0xf]
      %v748 = vld [vmem:[%s9 + $0x7c] sm:$0xf]
      %v749 = vld [vmem:[%s9 + $0x80] sm:$0xf]
      %v750 = vld [vmem:[%s9 + $0x84] sm:$0xf]
      %v751 = vld [vmem:[%s9 + $0x88] sm:$0xf]
      %v752 = vld [vmem:[%s9 + $0x8c] sm:$0xf]
      %v753 = vld [vmem:[%s9 + $0x90] sm:$0xf]
      %v754 = vld [vmem:[%s9 + $0x94] sm:$0xf]
      %v755 = vld [vmem:[%s9 + $0x98] sm:$0xf]
      %v756 = vld [vmem:[%s9 + $0x9c] sm:$0xf]
      %v757 = vld [vmem:[%s9 + $0xa0] sm:$0xf]
      %v758 = vld [vmem:[%s9 + $0xa4] sm:$0xf]
      %v759 = vld [vmem:[%s9 + $0xa8] sm:$0xf]
      %v760 = vld [vmem:[%s9 + $0xac] sm:$0xf]
      %v761 = vld [vmem:[%s9 + $0xb0] sm:$0xf]
      %v762 = vld [vmem:[%s9 + $0xb4] sm:$0xf]
      %v763 = vld [vmem:[%s9 + $0xb8] sm:$0xf]
      %v764 = vld [vmem:[%s9 + $0xbc] sm:$0xf]
      %v765 = vld [vmem:[%s7] sm:$0x1]
      %v767 = vlaneseq
      %v768 = vshrl.u32 %v767, 7
      %v769 = vsub.s32 0, %v768
      %v770 = vrot.slane %v765, %v769
      %v820 = vunpack.c.l.b16 %v717
      %v821 = vunpack.c.l.b16 %v718
      %v822 = vunpack.c.l.b16 %v719
      %v823 = vunpack.c.l.b16 %v720
      %v824 = vunpack.c.l.b16 %v721
      %v825 = vunpack.c.l.b16 %v722
      %v826 = vunpack.c.l.b16 %v723
      %v827 = vunpack.c.l.b16 %v724
      %v828 = vunpack.c.l.b16 %v725
      %v829 = vunpack.c.l.b16 %v726
      %v830 = vunpack.c.l.b16 %v727
      %v831 = vunpack.c.l.b16 %v728
      %v832 = vunpack.c.l.b16 %v729
      %v833 = vunpack.c.l.b16 %v730
      %v834 = vunpack.c.l.b16 %v731
      %v835 = vunpack.c.l.b16 %v732
      %v836 = vunpack.c.l.b16 %v733
      %v837 = vunpack.c.l.b16 %v734
      %v838 = vunpack.c.l.b16 %v735
      %v839 = vunpack.c.l.b16 %v736
      %v840 = vunpack.c.l.b16 %v737
      %v841 = vunpack.c.l.b16 %v738
      %v842 = vunpack.c.l.b16 %v739
      %v843 = vunpack.c.l.b16 %v740
      %v844 = vunpack.c.l.b16 %v741
      %v845 = vunpack.c.l.b16 %v742
      %v846 = vunpack.c.l.b16 %v743
      %v847 = vunpack.c.l.b16 %v744
      %v848 = vunpack.c.l.b16 %v745
      %v849 = vunpack.c.l.b16 %v746
      %v850 = vunpack.c.l.b16 %v747
      %v851 = vunpack.c.l.b16 %v748
      %v852 = vunpack.c.l.b16 %v749
      %v853 = vunpack.c.l.b16 %v750
      %v854 = vunpack.c.l.b16 %v751
      %v855 = vunpack.c.l.b16 %v752
      %v856 = vunpack.c.l.b16 %v753
      %v857 = vunpack.c.l.b16 %v754
      %v858 = vunpack.c.l.b16 %v755
      %v859 = vunpack.c.l.b16 %v756
      %v860 = vunpack.c.l.b16 %v757
      %v861 = vunpack.c.l.b16 %v758
      %v862 = vunpack.c.l.b16 %v759
      %v863 = vunpack.c.l.b16 %v760
      %v864 = vunpack.c.l.b16 %v761
      %v865 = vunpack.c.l.b16 %v762
      %v866 = vunpack.c.l.b16 %v763
      %v867 = vunpack.c.l.b16 %v764
      %v868 = vpack.c.b16 %v821, %v820
      %v869 = vpack.c.b16 %v823, %v822
      %v870 = vpack.c.b16 %v825, %v824
      %v871 = vpack.c.b16 %v827, %v826
      %v872 = vpack.c.b16 %v829, %v828
      %v873 = vpack.c.b16 %v831, %v830
      %v874 = vpack.c.b16 %v833, %v832
      %v875 = vpack.c.b16 %v835, %v834
      %v876 = vpack.c.b16 %v837, %v836
      %v877 = vpack.c.b16 %v839, %v838
      %v878 = vpack.c.b16 %v841, %v840
      %v879 = vpack.c.b16 %v843, %v842
      %v880 = vpack.c.b16 %v845, %v844
      %v881 = vpack.c.b16 %v847, %v846
      %v882 = vpack.c.b16 %v849, %v848
      %v883 = vpack.c.b16 %v851, %v850
      %v884 = vpack.c.b16 %v853, %v852
      %v885 = vpack.c.b16 %v855, %v854
      %v886 = vpack.c.b16 %v857, %v856
      %v887 = vpack.c.b16 %v859, %v858
      %v888 = vpack.c.b16 %v861, %v860
      %v889 = vpack.c.b16 %v863, %v862
      %v890 = vpack.c.b16 %v865, %v864
      %v891 = vpack.c.b16 %v867, %v866
      %916 = vmatprep.subr.bf16.mxu0 0
      %917 = vmatpush1.bf16.msra.mxu0 %v868
      %918 = vmatprep.subr.bf16.mxu0 0
      %919 = vmatpush1.bf16.msra.mxu0 %v869
      %920 = vmatprep.subr.bf16.mxu0 0
      %921 = vmatpush1.bf16.msra.mxu0 %v870
      %922 = vmatprep.subr.bf16.mxu0 0
      %923 = vmatpush1.bf16.msra.mxu0 %v871
      %924 = vmatprep.subr.bf16.mxu0 0
      %925 = vmatpush1.bf16.msra.mxu0 %v872
      %926 = vmatprep.subr.bf16.mxu0 0
      %927 = vmatpush1.bf16.msra.mxu0 %v873
      %928 = vmatprep.subr.bf16.mxu0 0
      %929 = vmatpush1.bf16.msra.mxu0 %v874
      %930 = vmatprep.subr.bf16.mxu0 0
      %931 = vmatpush1.bf16.msra.mxu0 %v875
      %932 = vmatprep.subr.bf16.mxu0 0
      %933 = vmatpush1.bf16.msra.mxu0 %v876
      %934 = vmatprep.subr.bf16.mxu0 0
      %935 = vmatpush1.bf16.msra.mxu0 %v877
      %936 = vmatprep.subr.bf16.mxu0 0
      %937 = vmatpush1.bf16.msra.mxu0 %v878
      %938 = vmatprep.subr.bf16.mxu0 0
      %939 = vmatpush1.bf16.msra.mxu0 %v879
      %940 = vmatprep.subr.bf16.mxu0 0
      %941 = vmatpush1.bf16.msra.mxu0 %v880
      %942 = vmatprep.subr.bf16.mxu0 0
      %943 = vmatpush1.bf16.msra.mxu0 %v881
      %944 = vmatprep.subr.bf16.mxu0 0
      %945 = vmatpush1.bf16.msra.mxu0 %v882
      %946 = vmatprep.subr.bf16.mxu0 0
      %947 = vmatpush1.bf16.msra.mxu0 %v883
      %948 = vmatprep.mubr.bf16.mxu0 %v715
      %949 = vmatmul.mubr.bf16.gmra.mrb[0].mxu0 %v714
      %v950 = vpop.f32.mrb[0].mxu0
      %v951 = vadd.f32 %v770, %v950
      %v952 = vpop.f32.mrb[0].mxu0
      %v953 = vpop.f32.mrb[0].mxu0
      %v954 = vpop.f32.mrb[0].mxu0
      %955 = vdwg.mxu0
      %956 = vmatprep.subr.bf16.mxu0 0
      %957 = vmatpush1.bf16.msra.mxu0 %v884
      %958 = vmatprep.subr.bf16.mxu0 0
      %959 = vmatpush1.bf16.msra.mxu0 %v885
      %960 = vmatprep.subr.bf16.mxu0 0
      %961 = vmatpush1.bf16.msra.mxu0 %v886
      %962 = vmatprep.subr.bf16.mxu0 0
      %963 = vmatpush1.bf16.msra.mxu0 %v887
      %964 = vmatprep.subr.bf16.mxu0 0
      %965 = vmatpush1.bf16.msra.mxu0 %v888
      %966 = vmatprep.subr.bf16.mxu0 0
      %967 = vmatpush1.bf16.msra.mxu0 %v889
      %968 = vmatprep.subr.bf16.mxu0 0
      %969 = vmatpush1.bf16.msra.mxu0 %v890
      %970 = vmatprep.subr.bf16.mxu0 0
      %971 = vmatpush1.bf16.msra.mxu0 %v891
      %972 = vmatprep.subr.bf16.mxu0 0
      %973 = vmatpush1.bf16.msra.mxu0 0
      %974 = vmatprep.subr.bf16.mxu0 0
      %975 = vmatpush1.bf16.msra.mxu0 0
      %976 = vmatprep.subr.bf16.mxu0 0
      %977 = vmatpush1.bf16.msra.mxu0 0
      %978 = vmatprep.subr.bf16.mxu0 0
      %979 = vmatpush1.bf16.msra.mxu0 0
      %980 = vmatprep.subr.bf16.mxu0 0
      %981 = vmatpush1.bf16.msra.mxu0 0
      %982 = vmatprep.subr.bf16.mxu0 0
      %983 = vmatpush1.bf16.msra.mxu0 0
      %984 = vmatprep.subr.bf16.mxu0 0
      %985 = vmatpush1.bf16.msra.mxu0 0
      %986 = vmatprep.subr.bf16.mxu0 0
      %987 = vmatpush1.bf16.msra.mxu0 0
      %988 = vmatprep.mubr.bf16.mxu0 0
      %989 = vmatmul.mubr.bf16.gmra.mrb[0].mxu0 %v716
      %v990 = vpop.f32.mrb[0].mxu0
      %v991 = vadd.f32 %v951, %v990
      %v992 = vpop.f32.mrb[0].mxu0
      %v993 = vpop.f32.mrb[0].mxu0
      %v994 = vpop.f32.mrb[0].mxu0
      %995 = vdwg.mxu0
      %v996 = vadd.f32 %v688, %v991
      %v997 = vld [vmem:[%s367] sm:$0xff]
      %v998 = vmul.f32 %v373, %v997
      %v999 = vadd.f32 %v996, %v998
      %1000 = vst [vmem:[%s371] sm:$0xff] %v999
      %p1001 = scmp.lt.s32.totalorder %s21, 1
      %s1002 = scalar_select %p1001, %s21, 1
      %s1003 = smul.addr %s1002, 8
      %s1004 = scalar_lea.vmem %s10, %s1003
      // Predicated region
      $region61: #{encoder_module.1} parent=59 // pred_check
        %p1005 = pneg %p259
      $region62: #{encoder_module.1} parent=59 // pred_check_branch
        %1007 = sbr.rel (%p1005) target = $region64
      $region63: #{encoder_module.1} parent=59 // pred_region
        _
      $region64: #{encoder_module.1} parent=59 // pred_fallthru
        _
    $region60: #{encoder_module.1} parent=5 // pred_fallthru
      _
    %p1008 = scmp.le.s32.totalorder 2, %s16
    // Predicated region
    $region65: #{encoder_module.1} parent=5 // pred_check
      %p1009 = pneg %p1008
    $region66: #{encoder_module.1} parent=5 // pred_check_branch
      %1011 = sbr.rel (%p1009) target = $region68
    $region67: #{encoder_module.1} parent=5 // pred_region
      %s1012 = ssub.s32 %s16, 2
      // Predicated region
      $region69: #{encoder_module.1} parent=67 // pred_check
        %p1013 = pneg %p265
      $region70: #{encoder_module.1} parent=67 // pred_check_branch
        %1015 = sbr.rel (%p1013) target = $region72
      $region71: #{encoder_module.1} parent=67 // pred_region
        %p1016 = scmp.lt.s32.totalorder %s22, 1
        %s1017 = scalar_select %p1016, %s22, 1
        %s1018 = smul.addr %s1017, 8
        %s1019 = scalar_lea.vmem %s10, %s1018
      $region72: #{encoder_module.1} parent=67 // pred_fallthru
        _
    $region68: #{encoder_module.1} parent=5 // pred_fallthru
      _
  $region6: #{encoder_module.1} parent=0 // loop_footer
    %s20 = sadd.s32 1, %s16
  $region7: #{encoder_module.1} parent=0 // loop_footer_branch
    %15 = sbr.rel target = $region3
  $region8: #{encoder_module.1} parent=0 // loop_exit
    _

</llo_original>
